<compile_context>
chip_gen: v7x
topology: tpu7x:2x2x1
jax: 0.10.0
libtpu: 0.0.40
codegen_flags: <defaults>
</compile_context>

<pallas_src>
import math

import jax
import jax.numpy as jnp
from jax.experimental import pallas as pl
from jax.experimental.pallas import tpu as pltpu


_BN_EPS = 1e-5
_LANE = 128


# ----------------------------- kernels --------------------------------------

def _linear_bn_relu_kernel(x_ref, w_ref, s_ref, g_ref, be_ref, o_ref):
    # x: [B, K] bf16, w: [K, TN] int8 (per-output-channel quantized).
    # Widen int8 -> f32 -> bf16 so the MXU path is identical on v5e/v6e/v7x.
    w = w_ref[...].astype(jnp.float32).astype(jnp.bfloat16)
    h = jnp.dot(x_ref[...], w, preferred_element_type=jnp.float32)
    h = h * s_ref[...]                     # per-channel dequant ([B,tn] mul, ~free)
    # Training-mode BatchNorm1d folded into per-feature scale/shift.
    # (Linear bias omitted: exactly cancelled by the mean subtraction.)
    mean = jnp.mean(h, axis=0, keepdims=True)
    var = jnp.mean(h * h, axis=0, keepdims=True) - mean * mean
    var = jnp.maximum(var, 0.0)            # guard one-pass cancellation
    scale = g_ref[...] * jax.lax.rsqrt(var + _BN_EPS)
    shift = be_ref[...] - mean * scale
    o_ref[...] = jnp.maximum(h * scale + shift, 0.0).astype(o_ref.dtype)


def _linear_bias_kernel(x_ref, w_ref, s_ref, b_ref, o_ref):
    w = w_ref[...].astype(jnp.float32).astype(jnp.bfloat16)
    h = jnp.dot(x_ref[...], w, preferred_element_type=jnp.float32)
    o_ref[...] = (h * s_ref[...] + b_ref[...]).astype(o_ref.dtype)


# ----------------------------- helpers ---------------------------------------

def _vmem_limit_bytes():
    """Generation-aware scoped-VMEM limit: ~64 MiB on v5e/v6e (128 MiB VMEM),
    ~48 MiB on v7x (64 MiB per-TC VMEM)."""
    default = 64 * 1024 * 1024
    try:
        cap = int(getattr(pltpu.get_tpu_info(), "vmem_capacity_bytes", 2 * default))
    except Exception:
        cap = 2 * default
    return min(default, (cap * 3) // 4)


def _pick_tile_n(n, k, b, vmem_limit):
    """Largest lane-dense output tile whose double-buffered int8 weight slab
    (plus activation / output / per-feature-param buffers) fits in ~80% of
    the scoped-VMEM limit."""
    for t in (1024, 512, 256, 128):
        if n % t:
            continue
        need = (2 * k * t           # int8 weight tile, double-buffered
                + 2 * b * k * 2     # bf16 activations
                + 2 * b * t * 4     # output tile (f32 worst case)
                + 8 * t * 4)        # per-feature params
        if need <= int(vmem_limit * 0.8):
            return t
    return min(n, _LANE)


def _quantize_per_channel(w):
    """w: [K, N] f32 -> (int8 [K, N], f32 scale [1, N]) with s = amax/127."""
    amax = jnp.max(jnp.abs(w), axis=0, keepdims=True)
    scale = jnp.maximum(amax, 1e-8) / 127.0
    wq = jnp.clip(jnp.round(w / scale), -127.0, 127.0).astype(jnp.int8)
    return wq, scale


def _tile_major(wq, tn):
    """[K, N] -> [N//tn, K, tn]: each output tile is one contiguous DMA slab."""
    k, n = wq.shape
    return jnp.transpose(wq.reshape(k, n // tn, tn), (1, 0, 2))


# ----------------------------- wrapper ---------------------------------------

def _tiled_layer(kernel, x, wq_tiled, feat_params, out_dtype, vmem_limit):
    """One fused (Linear [+BN+ReLU]) layer, tiled over output features.

    Batch stays un-tiled (BN statistics need the whole batch); output features
    are tiled so the int8 weight slabs stream through VMEM and the tile axis
    can be sharded across TensorCores.
    """
    B, K = x.shape
    n_tiles, _, tn = wq_tiled.shape
    N = n_tiles * tn

    in_specs = [
        pl.BlockSpec((B, K), lambda j: (0, 0)),            # full-batch activations
        pl.BlockSpec((None, K, tn), lambda j: (j, 0, 0)),  # contiguous int8 slab
    ] + [pl.BlockSpec((1, tn), lambda j: (0, j)) for _ in feat_params]
    out_spec = pl.BlockSpec((B, tn), lambda j: (0, j))

    cost = pl.CostEstimate(
        flops=2 * B * K * N,
        transcendentals=0,
        bytes_accessed=(x.size * x.dtype.itemsize
                        + wq_tiled.size                      # int8 weights
                        + sum(p.size * p.dtype.itemsize for p in feat_params)
                        + B * N * jnp.dtype(out_dtype).itemsize),
    )

    return pl.pallas_call(
        kernel,
        out_shape=jax.ShapeDtypeStruct((B, N), out_dtype),
        grid=(n_tiles,),
        in_specs=in_specs,
        out_specs=out_spec,
        compiler_params=pltpu.CompilerParams(
            dimension_semantics=("parallel",),
            vmem_limit_bytes=int(vmem_limit),
        ),
        cost_estimate=cost,
    )(x, wq_tiled, *feat_params)


def alexnet_decoder_forward(x, params):
    """x: [B, input_shape] float32.  Returns [B, num_classes] float32."""
    vmem_limit = params["vmem_limit"]
    xb = x.astype(jnp.bfloat16)
    h = _tiled_layer(_linear_bn_relu_kernel, xb, params["w1q_t"],
                     (params["s1"], params["g1"], params["be1"]),
                     jnp.bfloat16, vmem_limit)
    h = _tiled_layer(_linear_bn_relu_kernel, h, params["w2q_t"],
                     (params["s2"], params["g2"], params["be2"]),
                     jnp.bfloat16, vmem_limit)
    out = _tiled_layer(_linear_bias_kernel, h, params["w3q_t"],
                       (params["s3"], params["b3_pad"]),
                       jnp.float32, vmem_limit)
    return out[:, :params["num_classes"]]


# ----------------------------- params / reference ----------------------------

def init_params(key, input_shape, hidden, num_classes, batch):
    """Mirrors the PyTorch module's _initialise_weights:
    Linear weights ~ N(0, sqrt(2/(fan_out+fan_in))), Linear biases keep the
    default uniform(-1/sqrt(fan_in), 1/sqrt(fan_in)), BN gamma=1 / beta=0.

    Kernel layout: weights stored pre-transposed [in, out], quantized to int8
    with per-output-channel scales, and pre-shuffled to tile-major
    [N//tn, K, tn] slabs; the classifier weight/bias are zero-padded to a
    lane-dense 128 columns.  The un-tiled int8 weights and original biases
    are also kept for the pure-JAX reference."""
    keys = jax.random.split(key, 6)

    def linear(kw, kb, fan_in, fan_out):
        std = math.sqrt(2.0 / (fan_out + fan_in))
        w = std * jax.random.normal(kw, (fan_in, fan_out), jnp.float32)
        bound = 1.0 / math.sqrt(fan_in)
        b = jax.random.uniform(kb, (1, fan_out), jnp.float32, -bound, bound)
        return w, b

    w1, b1 = linear(keys[0], keys[1], input_shape, hidden)
    w2, b2 = linear(keys[2], keys[3], hidden, hidden)
    w3, b3 = linear(keys[4], keys[5], hidden, num_classes)

    n_pad = ((num_classes + _LANE - 1) // _LANE) * _LANE
    w3_pad = jnp.zeros((hidden, n_pad), jnp.float32).at[:, :num_classes].set(w3)
    b3_pad = jnp.zeros((1, n_pad), jnp.float32).at[:, :num_classes].set(b3)

    w1q, s1 = _quantize_per_channel(w1)
    w2q, s2 = _quantize_per_channel(w2)
    w3q, s3 = _quantize_per_channel(w3_pad)

    vmem_limit = _vmem_limit_bytes()
    tn1 = _pick_tile_n(hidden, input_shape, batch, vmem_limit)
    tn2 = _pick_tile_n(hidden, hidden, batch, vmem_limit)
    tn3 = _pick_tile_n(n_pad, hidden, batch, vmem_limit)

    ones = jnp.ones((1, hidden), jnp.float32)
    zeros = jnp.zeros((1, hidden), jnp.float32)
    return {
        # kernel-layout params
        "w1q_t": _tile_major(w1q, tn1), "s1": s1, "g1": ones, "be1": zeros,
        "w2q_t": _tile_major(w2q, tn2), "s2": s2, "g2": ones, "be2": zeros,
        "w3q_t": _tile_major(w3q, tn3), "s3": s3, "b3_pad": b3_pad,
        "vmem_limit": vmem_limit, "num_classes": num_classes,
        # reference-layout params (un-tiled int8 weights + original biases)
        "w1q": w1q, "b1": b1, "w2q": w2q, "b2": b2, "w3q": w3q,
    }


def reference_forward(x, params):
    """Naive formulation of the same math: un-tiled int8 weights dequantized
    in place, redundant Linear biases kept, unfolded two-pass training-mode
    BatchNorm, matching bf16 matmul inputs / f32 statistics.  Verifies that
    bias cancellation, the folded BN affine, and the tile-major int8 kernel
    path agree up to bf16 re-rounding of intermediate activations."""
    def bn_relu(h, g, be):
        m = jnp.mean(h, 0, keepdims=True)
        v = jnp.mean((h - m) ** 2, 0, keepdims=True)
        return jnp.maximum((h - m) / jnp.sqrt(v + _BN_EPS) * g + be, 0.0)

    def qdot(a, wq, s):
        return jnp.dot(a, wq.astype(jnp.bfloat16),
                       preferred_element_type=jnp.float32) * s

    xb = x.astype(jnp.bfloat16)
    h = qdot(xb, params["w1q"], params["s1"]) + params["b1"]
    h = bn_relu(h, params["g1"], params["be1"]).astype(jnp.bfloat16)
    h = qdot(h, params["w2q"], params["s2"]) + params["b2"]
    h = bn_relu(h, params["g2"], params["be2"]).astype(jnp.bfloat16)
    out = qdot(h, params["w3q"], params["s3"]) + params["b3_pad"]
    return out[:, :params["num_classes"]]


if __name__ == "__main__":
    # Small stand-in shapes (module's real sizes: input 9216, hidden 4096).
    # HIDDEN=384 exercises the multi-tile (3-step) grid on the hidden layers.
    B, INPUT_SHAPE, HIDDEN, NUM_CLASSES = 8, 128, 384, 10

    key = jax.random.PRNGKey(0)
    k_x, k_p = jax.random.split(key)
    x = jax.random.normal(k_x, (B, INPUT_SHAPE), jnp.float32)
    params = init_params(k_p, INPUT_SHAPE, HIDDEN, NUM_CLASSES, B)

    out = jax.block_until_ready(alexnet_decoder_forward(x, params))
    ref = jax.block_until_ready(reference_forward(x, params))

    assert out.shape == (B, NUM_CLASSES)
    # Kernel and reference use algebraically-equivalent but differently
    # rounded formulations (bias cancellation, folded BN, fused dequant);
    # tolerance covers bf16 re-rounding of intermediate activations only
    # (the int8 weights themselves are identical on both paths).
    err = jnp.max(jnp.abs(out - ref))
    assert err < 5e-3, float(err)

    print("KERNEL_OK")
</pallas_src>

<mosaic_0001>
module attributes {stable_mosaic.version = 11 : i64} {
  func.func @_linear_bn_relu_kernel(%arg0: i32, %arg1: memref<8x128xbf16, #tpu.memory_space<vmem>>, %arg2: memref<1x128x128xi8, #tpu.memory_space<vmem>>, %arg3: memref<1x128xf32, #tpu.memory_space<vmem>>, %arg4: memref<1x128xf32, #tpu.memory_space<vmem>>, %arg5: memref<1x128xf32, #tpu.memory_space<vmem>>, %arg6: memref<8x128xbf16, #tpu.memory_space<vmem>>) attributes {dimension_semantics = [#tpu.dimension_semantics<parallel>], iteration_bounds = array<i64: 3>, scalar_prefetch = 0 : i64, scratch_operands = 0 : i64, tpu.core_type = #tpu.core_type<tc>, window_params = [{pipeline_mode = #tpu.pipeline_mode<synchronous>, transform_indices = @transform_0, window_bounds = array<i64: 8, 128>}, {transform_indices = @transform_1, window_bounds = array<i64: 1, 128, 128>}, {transform_indices = @transform_2, window_bounds = array<i64: 1, 128>}, {transform_indices = @transform_3, window_bounds = array<i64: 1, 128>}, {transform_indices = @transform_4, window_bounds = array<i64: 1, 128>}, {transform_indices = @transform_5, window_bounds = array<i64: 8, 128>}]} {
    %c0 = arith.constant 0 : index
    %c0_0 = arith.constant 0 : index
    %c0_1 = arith.constant 0 : index
    %0 = vector.load %arg2[%c0, %c0_0, %c0_1] : memref<1x128x128xi8, #tpu.memory_space<vmem>>, vector<1x128x128xi8>
    %1 = vector.shape_cast %0 : vector<1x128x128xi8> to vector<128x128xi8>
    %2 = arith.sitofp %1 : vector<128x128xi8> to vector<128x128xf32>
    %3 = arith.truncf %2 : vector<128x128xf32> to vector<128x128xbf16>
    %c0_2 = arith.constant 0 : index
    %c0_3 = arith.constant 0 : index
    %4 = vector.load %arg1[%c0_2, %c0_3] : memref<8x128xbf16, #tpu.memory_space<vmem>>, vector<8x128xbf16>
    %cst = arith.constant dense<0.000000e+00> : vector<8x128xf32>
    %5 = tpu.matmul %4, %3, %cst {dimension_numbers = #tpu.dot_dimension_numbers<[1], [0], [0], [1], [0, 0, 1, 1], [], []>} : vector<8x128xbf16>, vector<128x128xbf16>, vector<8x128xf32> -> vector<8x128xf32>
    %c0_4 = arith.constant 0 : index
    %c0_5 = arith.constant 0 : index
    %6 = vector.load %arg3[%c0_4, %c0_5] : memref<1x128xf32, #tpu.memory_space<vmem>>, vector<1x128xf32>
    %7 = vector.broadcast %6 : vector<1x128xf32> to vector<8x128xf32>
    %8 = arith.mulf %5, %7 : vector<8x128xf32>
    %cst_6 = arith.constant dense<0.000000e+00> : vector<128xf32>
    %9 = vector.multi_reduction <add>, %8, %cst_6 [0] : vector<8x128xf32> to vector<128xf32>
    %10 = vector.shape_cast %9 : vector<128xf32> to vector<1x128xf32>
    %cst_7 = arith.constant 8.000000e+00 : f32
    %11 = vector.broadcast %cst_7 : f32 to vector<1x128xf32>
    %12 = arith.divf %10, %11 : vector<1x128xf32>
    %13 = arith.mulf %8, %8 : vector<8x128xf32>
    %cst_8 = arith.constant dense<0.000000e+00> : vector<128xf32>
    %14 = vector.multi_reduction <add>, %13, %cst_8 [0] : vector<8x128xf32> to vector<128xf32>
    %15 = vector.shape_cast %14 : vector<128xf32> to vector<1x128xf32>
    %cst_9 = arith.constant 8.000000e+00 : f32
    %16 = vector.broadcast %cst_9 : f32 to vector<1x128xf32>
    %17 = arith.divf %15, %16 : vector<1x128xf32>
    %18 = arith.mulf %12, %12 : vector<1x128xf32>
    %19 = arith.subf %17, %18 : vector<1x128xf32>
    %cst_10 = arith.constant 0.000000e+00 : f32
    %20 = vector.broadcast %cst_10 : f32 to vector<1x128xf32>
    %21 = arith.maximumf %19, %20 : vector<1x128xf32>
    %c0_11 = arith.constant 0 : index
    %c0_12 = arith.constant 0 : index
    %22 = vector.load %arg4[%c0_11, %c0_12] : memref<1x128xf32, #tpu.memory_space<vmem>>, vector<1x128xf32>
    %cst_13 = arith.constant 9.99999974E-6 : f32
    %23 = vector.broadcast %cst_13 : f32 to vector<1x128xf32>
    %24 = arith.addf %21, %23 : vector<1x128xf32>
    %25 = math.rsqrt %24 : vector<1x128xf32>
    %26 = arith.mulf %22, %25 : vector<1x128xf32>
    %c0_14 = arith.constant 0 : index
    %c0_15 = arith.constant 0 : index
    %27 = vector.load %arg5[%c0_14, %c0_15] : memref<1x128xf32, #tpu.memory_space<vmem>>, vector<1x128xf32>
    %28 = arith.mulf %12, %26 : vector<1x128xf32>
    %29 = arith.subf %27, %28 : vector<1x128xf32>
    %30 = vector.broadcast %26 : vector<1x128xf32> to vector<8x128xf32>
    %31 = arith.mulf %8, %30 : vector<8x128xf32>
    %32 = vector.broadcast %29 : vector<1x128xf32> to vector<8x128xf32>
    %33 = arith.addf %31, %32 : vector<8x128xf32>
    %cst_16 = arith.constant 0.000000e+00 : f32
    %34 = vector.broadcast %cst_16 : f32 to vector<8x128xf32>
    %35 = arith.maximumf %33, %34 : vector<8x128xf32>
    %36 = arith.truncf %35 : vector<8x128xf32> to vector<8x128xbf16>
    %c0_17 = arith.constant 0 : index
    %c0_18 = arith.constant 0 : index
    %37 = vector.load %arg6[%c0_17, %c0_18] : memref<8x128xbf16, #tpu.memory_space<vmem>>, vector<8x128xbf16>
    tpu.vector_store %arg6[%c0_17, %c0_18], %36 {strides = array<i32>} : memref<8x128xbf16, #tpu.memory_space<vmem>>, vector<8x128xbf16>,
    return
  }
  func.func @transform_0(%arg0: i32) -> (i32, i32) {
    %c0_i32 = arith.constant 0 : i32
    %c0_i32_0 = arith.constant 0 : i32
    %c0_i32_1 = arith.constant 0 : i32
    return %c0_i32, %c0_i32_0 : i32, i32
  }
  func.func @transform_1(%arg0: i32) -> (i32, i32, i32) {
    %c0_i32 = arith.constant 0 : i32
    %c0_i32_0 = arith.constant 0 : i32
    %c0_i32_1 = arith.constant 0 : i32
    return %arg0, %c0_i32, %c0_i32_0 : i32, i32, i32
  }
  func.func @transform_2(%arg0: i32) -> (i32, i32) {
    %c0_i32 = arith.constant 0 : i32
    %c0_i32_0 = arith.constant 0 : i32
    return %c0_i32, %arg0 : i32, i32
  }
  func.func @transform_3(%arg0: i32) -> (i32, i32) {
    %c0_i32 = arith.constant 0 : i32
    %c0_i32_0 = arith.constant 0 : i32
    return %c0_i32, %arg0 : i32, i32
  }
  func.func @transform_4(%arg0: i32) -> (i32, i32) {
    %c0_i32 = arith.constant 0 : i32
    %c0_i32_0 = arith.constant 0 : i32
    return %c0_i32, %arg0 : i32, i32
  }
  func.func @transform_5(%arg0: i32) -> (i32, i32) {
    %c0_i32 = arith.constant 0 : i32
    %c0_i32_0 = arith.constant 0 : i32
    return %c0_i32, %arg0 : i32, i32
  }
}

</mosaic_0001>

<llo_original>
// kernel: tpu_custom_call.1
$region0: #{tpu_custom_call.1}
  #allocation0 [shape = 'u32[]', space=smem, size = 0x4, offset = 0x4, fixed_abs, tag = 'smem constant byte address 0x4 - core index']
  #allocation1 [shape = 'u32[144,128]{1,0:T(1,128)}', space=vmem, size = 0x12000, scoped, tag = 'internal scratch']
  %s0 = inlined_call_operand.hbm [shape: bf16[8,128], index: 0, kind: input, shape index: {}]
  %s1 = inlined_call_operand.hbm [shape: s8[3,128,128], index: 1, kind: input, shape index: {}]
  %s2 = inlined_call_operand.hbm [shape: f32[1,384], index: 2, kind: input, shape index: {}]
  %s3 = inlined_call_operand.hbm [shape: f32[1,384], index: 3, kind: input, shape index: {}]
  %s4 = inlined_call_operand.hbm [shape: f32[1,384], index: 4, kind: input, shape index: {}]
  %s5 = inlined_call_operand.hbm [shape: bf16[8,384], index: 5, kind: output, shape index: {}]
  %s6 = sld [smem:[#allocation0]]
  $region73: #{tpu_custom_call.1} parent=0
    _
  %s8 = ssub.s32 1, %s6
  %s9 = scalar_select 0, %s8, %s6
  $region1: #{tpu_custom_call.1} parent=0
    #allocation2 [shape = 'u8[2048]{0}', space=vmem, size = 0x800, scoped, tag = 'input window, operand 0, single buffered']
    #allocation3 [shape = 's32[2]{0}', space=sflag, size = 0x8, scoped, tag = 'scoped memory for tpu_custom_call.1']
    #allocation4 [shape = 's32[2]{0}', space=sflag, size = 0x8, scoped, tag = 'scoped memory for tpu_custom_call.1']
    #allocation5 [shape = 'u8[32768]{0}', space=vmem, size = 0x8000, scoped, tag = 'input window, operand 1']
    #allocation6 [shape = 's32[2]{0}', space=sflag, size = 0x8, scoped, tag = 'scoped memory for tpu_custom_call.1']
    #allocation7 [shape = 'u8[1024]{0}', space=vmem, size = 0x400, scoped, tag = 'input window, operand 2']
    #allocation8 [shape = 'u8[1024]{0}', space=vmem, size = 0x400, scoped, tag = 'input window, operand 3']
    #allocation9 [shape = 's32[2]{0}', space=sflag, size = 0x8, scoped, tag = 'scoped memory for tpu_custom_call.1']
    #allocation10 [shape = 'u8[1024]{0}', space=vmem, size = 0x400, scoped, tag = 'input window, operand 4']
    #allocation11 [shape = 'u8[4096]{0}', space=vmem, size = 0x1000, scoped, tag = 'output window, operand 0']
    %10 = vsyncpa [#allocation3], 0
    %11 = vsyncpa [#allocation6], 0
    %s12 = scalar_lea.sflag [#allocation6], 1
    %13 = vsyncpa %s12, 0
    %14 = vsyncpa [#allocation9], 0
    %s15 = scalar_lea.sflag [#allocation9], 1
    %16 = vsyncpa %s15, 0
    %17 = vsyncpa [#allocation4], 0
    %s18 = scalar_lea.sflag [#allocation4], 1
    %19 = vsyncpa %s18, 0
    loop: start=0, step=1, limit=5
    $region2: #{tpu_custom_call.1} parent=1 // loop_pre_header
      _
    $region3: #{tpu_custom_call.1} parent=1 // loop_header
      %s21 = sphi 0, %s25
      %p22 = scmp.ge.s32.totalorder %s21, 5
      %s29 = sphi 0, %s29
      %s31 = sphi 0, %s29
      %s32 = sphi 0, %s31
      %s46 = sphi 0, %s32
      %s52 = sphi 0, %s54
      %s55 = sphi 0, %s52
      %s56 = sphi 0, %s55
      %s72 = sphi 0, %s56
      %s78 = sphi 0, %s80
      %s81 = sphi 0, %s78
      %s82 = sphi 0, %s81
      %s98 = sphi 0, %s82
      %s104 = sphi 0, %s106
      %s107 = sphi 0, %s104
      %s108 = sphi 0, %s107
      %s124 = sphi 0, %s108
      %s130 = sphi 0, %s132
      %s133 = sphi 0, %s130
      %s134 = sphi 0, %s133
      %s150 = sphi 0, %s134
      %s156 = sphi 0, %s158
      %s159 = sphi 0, %s156
      %s160 = sphi 0, %s159
      %s176 = sphi 0, %s160
    $region4: #{tpu_custom_call.1} parent=1 // loop_header_branch
      %24 = sbr.rel (%p22) target = $region8
    $region5: #{tpu_custom_call.1} parent=1 // loop_body
      %s26 = ssub.s32 %s21, 1
      %s27 = ssub.s32 %s21, 2
      %s28 = sadd.s32 %s21, 1
      %s30 = sadd.s32 %s29, 1
      %p33 = scmp.eq.s32.totalorder %s21, 2
      %p34 = scmp.ne.s32.totalorder %s29, %s31
      %p35 = scmp.eq.s32.totalorder %s21, 0
      %p36 = por %p34, %p35
      %p37 = scmp.ne.s32.totalorder %s29, %s31
      %p38 = scmp.eq.s32.totalorder %s26, 2
      %p39 = por %p37, %p38
      %p40 = scmp.ne.s32.totalorder %s31, %s32
      %p41 = scmp.eq.s32.totalorder %s26, 0
      %p42 = por %p40, %p41
      %p43 = scmp.ne.s32.totalorder %s31, %s32
      %p44 = scmp.eq.s32.totalorder %s27, 2
      %p45 = por %p43, %p44
      %p47 = scmp.ne.s32.totalorder %s32, %s46
      %p48 = scmp.eq.s32.totalorder %s27, 0
      %p49 = por %p47, %p48
      %s50 = ssub.s32 %s21, %s28
      %p51 = scmp.eq.s32.totalorder %s50, 0
      %s53 = sadd.s32 %s52, 1
      %s54 = scalar_select %p51, %s52, %s53
      %p57 = pneg %p51
      %p58 = scmp.eq.s32.totalorder %s21, 2
      %p59 = por %p57, %p58
      %p60 = scmp.ne.s32.totalorder %s52, %s55
      %p61 = scmp.eq.s32.totalorder %s21, 0
      %p62 = por %p60, %p61
      %p63 = scmp.ne.s32.totalorder %s52, %s55
      %p64 = scmp.eq.s32.totalorder %s26, 2
      %p65 = por %p63, %p64
      %p66 = scmp.ne.s32.totalorder %s55, %s56
      %p67 = scmp.eq.s32.totalorder %s26, 0
      %p68 = por %p66, %p67
      %p69 = scmp.ne.s32.totalorder %s55, %s56
      %p70 = scmp.eq.s32.totalorder %s27, 2
      %p71 = por %p69, %p70
      %p73 = scmp.ne.s32.totalorder %s56, %s72
      %p74 = scmp.eq.s32.totalorder %s27, 0
      %p75 = por %p73, %p74
      %s76 = ssub.s32 %s21, %s28
      %p77 = scmp.eq.s32.totalorder %s76, 0
      %s79 = sadd.s32 %s78, 1
      %s80 = scalar_select %p77, %s78, %s79
      %p83 = pneg %p77
      %p84 = scmp.eq.s32.totalorder %s21, 2
      %p85 = por %p83, %p84
      %p86 = scmp.ne.s32.totalorder %s78, %s81
      %p87 = scmp.eq.s32.totalorder %s21, 0
      %p88 = por %p86, %p87
      %p89 = scmp.ne.s32.totalorder %s78, %s81
      %p90 = scmp.eq.s32.totalorder %s26, 2
      %p91 = por %p89, %p90
      %p92 = scmp.ne.s32.totalorder %s81, %s82
      %p93 = scmp.eq.s32.totalorder %s26, 0
      %p94 = por %p92, %p93
      %p95 = scmp.ne.s32.totalorder %s81, %s82
      %p96 = scmp.eq.s32.totalorder %s27, 2
      %p97 = por %p95, %p96
      %p99 = scmp.ne.s32.totalorder %s82, %s98
      %p100 = scmp.eq.s32.totalorder %s27, 0
      %p101 = por %p99, %p100
      %s102 = ssub.s32 %s21, %s28
      %p103 = scmp.eq.s32.totalorder %s102, 0
      %s105 = sadd.s32 %s104, 1
      %s106 = scalar_select %p103, %s104, %s105
      %p109 = pneg %p103
      %p110 = scmp.eq.s32.totalorder %s21, 2
      %p111 = por %p109, %p110
      %p112 = scmp.ne.s32.totalorder %s104, %s107
      %p113 = scmp.eq.s32.totalorder %s21, 0
      %p114 = por %p112, %p113
      %p115 = scmp.ne.s32.totalorder %s104, %s107
      %p116 = scmp.eq.s32.totalorder %s26, 2
      %p117 = por %p115, %p116
      %p118 = scmp.ne.s32.totalorder %s107, %s108
      %p119 = scmp.eq.s32.totalorder %s26, 0
      %p120 = por %p118, %p119
      %p121 = scmp.ne.s32.totalorder %s107, %s108
      %p122 = scmp.eq.s32.totalorder %s27, 2
      %p123 = por %p121, %p122
      %p125 = scmp.ne.s32.totalorder %s108, %s124
      %p126 = scmp.eq.s32.totalorder %s27, 0
      %p127 = por %p125, %p126
      %s128 = ssub.s32 %s21, %s28
      %p129 = scmp.eq.s32.totalorder %s128, 0
      %s131 = sadd.s32 %s130, 1
      %s132 = scalar_select %p129, %s130, %s131
      %p135 = pneg %p129
      %p136 = scmp.eq.s32.totalorder %s21, 2
      %p137 = por %p135, %p136
      %p138 = scmp.ne.s32.totalorder %s130, %s133
      %p139 = scmp.eq.s32.totalorder %s21, 0
      %p140 = por %p138, %p139
      %p141 = scmp.ne.s32.totalorder %s130, %s133
      %p142 = scmp.eq.s32.totalorder %s26, 2
      %p143 = por %p141, %p142
      %p144 = scmp.ne.s32.totalorder %s133, %s134
      %p145 = scmp.eq.s32.totalorder %s26, 0
      %p146 = por %p144, %p145
      %p147 = scmp.ne.s32.totalorder %s133, %s134
      %p148 = scmp.eq.s32.totalorder %s27, 2
      %p149 = por %p147, %p148
      %p151 = scmp.ne.s32.totalorder %s134, %s150
      %p152 = scmp.eq.s32.totalorder %s27, 0
      %p153 = por %p151, %p152
      %s154 = ssub.s32 %s21, %s28
      %p155 = scmp.eq.s32.totalorder %s154, 0
      %s157 = sadd.s32 %s156, 1
      %s158 = scalar_select %p155, %s156, %s157
      %p161 = pneg %p155
      %p162 = scmp.eq.s32.totalorder %s21, 2
      %p163 = por %p161, %p162
      %p164 = scmp.ne.s32.totalorder %s156, %s159
      %p165 = scmp.eq.s32.totalorder %s21, 0
      %p166 = por %p164, %p165
      %p167 = scmp.ne.s32.totalorder %s156, %s159
      %p168 = scmp.eq.s32.totalorder %s26, 2
      %p169 = por %p167, %p168
      %p170 = scmp.ne.s32.totalorder %s159, %s160
      %p171 = scmp.eq.s32.totalorder %s26, 0
      %p172 = por %p170, %p171
      %p173 = scmp.ne.s32.totalorder %s159, %s160
      %p174 = scmp.eq.s32.totalorder %s27, 2
      %p175 = por %p173, %p174
      %p177 = scmp.ne.s32.totalorder %s160, %s176
      %p178 = scmp.eq.s32.totalorder %s27, 0
      %p179 = por %p177, %p178
      %p180 = scmp.le.s32.totalorder 1, %s21
      %p181 = scmp.lt.s32.totalorder %s21, 4
      %p182 = pnand %p180, %p181
      %p183 = pneg %p182
      // Predicated region
      $region9: #{tpu_custom_call.1} parent=5 // pred_check
        _
      $region10: #{tpu_custom_call.1} parent=5 // pred_check_branch
        %185 = sbr.rel (%p182) target = $region12
      $region11: #{tpu_custom_call.1} parent=5 // pred_region
        %s186 = ssub.s32 %s21, 1
        // Predicated region
        $region13: #{tpu_custom_call.1} parent=11 // pred_check
          %p187 = pneg %p42
        $region14: #{tpu_custom_call.1} parent=11 // pred_check_branch
          %189 = sbr.rel (%p187) target = $region16
        $region15: #{tpu_custom_call.1} parent=11 // pred_region
          %s191 = ssub.s32 64, 64
          %192 = vsyncadd [#allocation3], %s191
          %s194 = sshll.u32 [#allocation2], 4
          %s195 = int_to_ptr.vmem [resolvable:$true] %s194
          %197 = dma.hbm_to_vmem [thread:$0]  %s0, 64, %s195, [#allocation3]
        $region16: #{tpu_custom_call.1} parent=11 // pred_fallthru
          _
      $region12: #{tpu_custom_call.1} parent=5 // pred_fallthru
        _
      %p198 = scmp.lt.s32.totalorder %s21, 3
      // Predicated region
      $region17: #{tpu_custom_call.1} parent=5 // pred_check
        %p199 = pneg %p198
      $region18: #{tpu_custom_call.1} parent=5 // pred_check_branch
        %201 = sbr.rel (%p199) target = $region20
      $region19: #{tpu_custom_call.1} parent=5 // pred_region
        // Predicated region
        $region21: #{tpu_custom_call.1} parent=19 // pred_check
          %p202 = pneg %p62
        $region22: #{tpu_custom_call.1} parent=19 // pred_check_branch
          %204 = sbr.rel (%p202) target = $region24
        $region23: #{tpu_custom_call.1} parent=19 // pred_region
          %s205 = sand.u32 %s21, 1
          %s206 = scalar_lea.sflag [#allocation6], %s205
          %s207 = sand.u32 %s52, 1
          %s208 = smul.addr %s207, 32
          %s209 = scalar_lea.vmem [#allocation5], %s208
          %s211 = ssub.s32 512, 512
          %212 = vsyncadd %s206, %s211
          %s213 = smul.addr %s21, 4
          %s214 = smul.addr %s213, 128
          %s215 = scalar_lea.hbm %s1, %s214
          %s216 = sshll.u32 %s209, 4
          %s217 = int_to_ptr.vmem [resolvable:$true] %s216
          %222 = dma.hbm_to_vmem [thread:$0]  %s215, 512, %s217, %s206, 128, 128, 8
        $region24: #{tpu_custom_call.1} parent=19 // pred_fallthru
          _
        // Predicated region
        $region25: #{tpu_custom_call.1} parent=19 // pred_check
          %p223 = pneg %p88
        $region26: #{tpu_custom_call.1} parent=19 // pred_check_branch
          %225 = sbr.rel (%p223) target = $region28
        $region27: #{tpu_custom_call.1} parent=19 // pred_region
          %s226 = sand.u32 %s21, 1
          %s227 = scalar_lea.sflag [#allocation6], %s226
          %s228 = sand.u32 %s78, 1
          %s229 = scalar_lea.vmem [#allocation7], %s228
          %s231 = ssub.s32 16, 16
          %232 = vsyncadd %s227, %s231
          %s233 = smul.addr %s21, 16
          %s234 = scalar_lea.hbm %s2, %s233
          %s236 = sshll.u32 %s229, 4
          %s237 = int_to_ptr.vmem [resolvable:$true] %s236
          %239 = dma.hbm_to_vmem [thread:$0]  %s234, 16, %s237, %s227
        $region28: #{tpu_custom_call.1} parent=19 // pred_fallthru
          _
        // Predicated region
        $region29: #{tpu_custom_call.1} parent=19 // pred_check
          %p240 = pneg %p114
        $region30: #{tpu_custom_call.1} parent=19 // pred_check_branch
          %242 = sbr.rel (%p240) target = $region32
        $region31: #{tpu_custom_call.1} parent=19 // pred_region
          %s243 = sand.u32 %s21, 1
          %s244 = scalar_lea.sflag [#allocation9], %s243
          %s245 = sand.u32 %s104, 1
          %s246 = scalar_lea.vmem [#allocation8], %s245
          %s248 = ssub.s32 16, 16
          %249 = vsyncadd %s244, %s248
          %s250 = smul.addr %s21, 16
          %s251 = scalar_lea.hbm %s3, %s250
          %s253 = sshll.u32 %s246, 4
          %s254 = int_to_ptr.vmem [resolvable:$true] %s253
          %256 = dma.hbm_to_vmem [thread:$0]  %s251, 16, %s254, %s244
        $region32: #{tpu_custom_call.1} parent=19 // pred_fallthru
          _
        // Predicated region
        $region33: #{tpu_custom_call.1} parent=19 // pred_check
          %p257 = pneg %p140
        $region34: #{tpu_custom_call.1} parent=19 // pred_check_branch
          %259 = sbr.rel (%p257) target = $region36
        $region35: #{tpu_custom_call.1} parent=19 // pred_region
          %s260 = sand.u32 %s21, 1
          %s261 = scalar_lea.sflag [#allocation9], %s260
          %s262 = sand.u32 %s130, 1
          %s263 = scalar_lea.vmem [#allocation10], %s262
          %s265 = ssub.s32 16, 16
          %266 = vsyncadd %s261, %s265
          %s267 = smul.addr %s21, 16
          %s268 = scalar_lea.hbm %s4, %s267
          %s270 = sshll.u32 %s263, 4
          %s271 = int_to_ptr.vmem [resolvable:$true] %s270
          %273 = dma.hbm_to_vmem [thread:$0]  %s268, 16, %s271, %s261
        $region36: #{tpu_custom_call.1} parent=19 // pred_fallthru
          _
      $region20: #{tpu_custom_call.1} parent=5 // pred_fallthru
        _
      %p274 = scmp.le.s32.totalorder 1, %s21
      %p275 = scmp.lt.s32.totalorder %s21, 4
      %p276 = pnand %p274, %p275
      %p277 = pneg %p276
      // Predicated region
      $region37: #{tpu_custom_call.1} parent=5 // pred_check
        _
      $region38: #{tpu_custom_call.1} parent=5 // pred_check_branch
        %279 = sbr.rel (%p276) target = $region40
      $region39: #{tpu_custom_call.1} parent=5 // pred_region
        %s280 = ssub.s32 %s21, 1
        // Predicated region
        $region41: #{tpu_custom_call.1} parent=39 // pred_check
          %p281 = pneg %p42
        $region42: #{tpu_custom_call.1} parent=39 // pred_check_branch
          %283 = sbr.rel (%p281) target = $region44
        $region43: #{tpu_custom_call.1} parent=39 // pred_region
          %284 = dma.done [#allocation3], 64
        $region44: #{tpu_custom_call.1} parent=39 // pred_fallthru
          _
        %s285 = sand.u32 %s26, 1
        %s286 = scalar_lea.sflag [#allocation6], %s285
        %s287 = sand.u32 %s55, 1
        %s288 = smul.addr %s287, 32
        %s289 = scalar_lea.vmem [#allocation5], %s288
        // Predicated region
        $region45: #{tpu_custom_call.1} parent=39 // pred_check
          %p290 = pneg %p68
        $region46: #{tpu_custom_call.1} parent=39 // pred_check_branch
          %292 = sbr.rel (%p290) target = $region48
        $region47: #{tpu_custom_call.1} parent=39 // pred_region
          %293 = dma.done %s286, 512
        $region48: #{tpu_custom_call.1} parent=39 // pred_fallthru
          _
        %s294 = sand.u32 %s26, 1
        %s295 = scalar_lea.sflag [#allocation6], %s294
        %s296 = sand.u32 %s81, 1
        %s297 = scalar_lea.vmem [#allocation7], %s296
        // Predicated region
        $region49: #{tpu_custom_call.1} parent=39 // pred_check
          %p298 = pneg %p94
        $region50: #{tpu_custom_call.1} parent=39 // pred_check_branch
          %300 = sbr.rel (%p298) target = $region52
        $region51: #{tpu_custom_call.1} parent=39 // pred_region
          %301 = dma.done %s295, 16
        $region52: #{tpu_custom_call.1} parent=39 // pred_fallthru
          _
        %s302 = sand.u32 %s26, 1
        %s303 = scalar_lea.sflag [#allocation9], %s302
        %s304 = sand.u32 %s107, 1
        %s305 = scalar_lea.vmem [#allocation8], %s304
        // Predicated region
        $region53: #{tpu_custom_call.1} parent=39 // pred_check
          %p306 = pneg %p120
        $region54: #{tpu_custom_call.1} parent=39 // pred_check_branch
          %308 = sbr.rel (%p306) target = $region56
        $region55: #{tpu_custom_call.1} parent=39 // pred_region
          %309 = dma.done %s303, 16
        $region56: #{tpu_custom_call.1} parent=39 // pred_fallthru
          _
        %s310 = sand.u32 %s26, 1
        %s311 = scalar_lea.sflag [#allocation9], %s310
        %s312 = sand.u32 %s133, 1
        %s313 = scalar_lea.vmem [#allocation10], %s312
        // Predicated region
        $region57: #{tpu_custom_call.1} parent=39 // pred_check
          %p314 = pneg %p146
        $region58: #{tpu_custom_call.1} parent=39 // pred_check_branch
          %316 = sbr.rel (%p314) target = $region60
        $region59: #{tpu_custom_call.1} parent=39 // pred_region
          %317 = dma.done %s311, 16
        $region60: #{tpu_custom_call.1} parent=39 // pred_fallthru
          _
        %p318 = pneg %p42
        %p319 = pneg %p39
        %s320 = sand.u32 %s26, 1
        %s321 = scalar_lea.sflag [#allocation6], %s320
        %s322 = sand.u32 %s55, 1
        %s323 = smul.addr %s322, 32
        %s324 = scalar_lea.vmem [#allocation5], %s323
        %p325 = pneg %p68
        %p326 = pneg %p65
        %s327 = sand.u32 %s26, 1
        %s328 = scalar_lea.sflag [#allocation6], %s327
        %s329 = sand.u32 %s81, 1
        %s330 = scalar_lea.vmem [#allocation7], %s329
        %p331 = pneg %p94
        %p332 = pneg %p91
        %s333 = sand.u32 %s26, 1
        %s334 = scalar_lea.sflag [#allocation9], %s333
        %s335 = sand.u32 %s107, 1
        %s336 = scalar_lea.vmem [#allocation8], %s335
        %p337 = pneg %p120
        %p338 = pneg %p117
        %s339 = sand.u32 %s26, 1
        %s340 = scalar_lea.sflag [#allocation9], %s339
        %s341 = sand.u32 %s133, 1
        %s342 = scalar_lea.vmem [#allocation10], %s341
        %p343 = pneg %p146
        %p344 = pneg %p143
        %p345 = pneg %p172
        %p346 = pneg %p169
        %s347 = sand.u32 %s159, 1
        %s348 = scalar_lea.sflag [#allocation4], %s347
        %s349 = sand.u32 %s159, 1
        %s350 = smul.addr %s349, 4
        %s351 = scalar_lea.vmem [#allocation11], %s350
        %v353 = vld [vmem:[%s289] sm:$0xff]
        %v354 = vld [vmem:[%s289 + $0x8] sm:$0xff]
        %v355 = vld [vmem:[%s289 + $0x10] sm:$0xff]
        %v356 = vld [vmem:[%s289 + $0x18] sm:$0xff]
        %v357 = vunpack.c.l.s8.bf16 %v353
        %v358 = vunpack.c.h.s8.bf16 %v353
        %v359 = vunpack.c.l.s8.bf16 %v354
        %v360 = vunpack.c.h.s8.bf16 %v354
        %v361 = vunpack.c.l.s8.bf16 %v355
        %v362 = vunpack.c.h.s8.bf16 %v355
        %v363 = vunpack.c.l.s8.bf16 %v356
        %v364 = vunpack.c.h.s8.bf16 %v356
        %v365 = vld [vmem:[#allocation2] sm:$0xf]
        %366 = vmatprep.subr.bf16.mxu0 0
        %367 = vmatpush1.bf16.msra.mxu0 %v357
        %368 = vmatprep.subr.bf16.mxu0 0
        %369 = vmatpush1.bf16.msra.mxu0 %v358
        %370 = vmatprep.subr.bf16.mxu0 0
        %371 = vmatpush1.bf16.msra.mxu0 %v359
        %372 = vmatprep.subr.bf16.mxu0 0
        %373 = vmatpush1.bf16.msra.mxu0 %v360
        %374 = vmatprep.subr.bf16.mxu0 0
        %375 = vmatpush1.bf16.msra.mxu0 %v361
        %376 = vmatprep.subr.bf16.mxu0 0
        %377 = vmatpush1.bf16.msra.mxu0 %v362
        %378 = vmatprep.subr.bf16.mxu0 0
        %379 = vmatpush1.bf16.msra.mxu0 %v363
        %380 = vmatprep.subr.bf16.mxu0 0
        %381 = vmatpush1.bf16.msra.mxu0 %v364
        %382 = vmatprep.subr.bf16.mxu0 0
        %383 = vmatpush1.bf16.msra.mxu0 0
        %384 = vmatprep.subr.bf16.mxu0 0
        %385 = vmatpush1.bf16.msra.mxu0 0
        %386 = vmatprep.subr.bf16.mxu0 0
        %387 = vmatpush1.bf16.msra.mxu0 0
        %388 = vmatprep.subr.bf16.mxu0 0
        %389 = vmatpush1.bf16.msra.mxu0 0
        %390 = vmatprep.subr.bf16.mxu0 0
        %391 = vmatpush1.bf16.msra.mxu0 0
        %392 = vmatprep.subr.bf16.mxu0 0
        %393 = vmatpush1.bf16.msra.mxu0 0
        %394 = vmatprep.subr.bf16.mxu0 0
        %395 = vmatpush1.bf16.msra.mxu0 0
        %396 = vmatprep.subr.bf16.mxu0 0
        %397 = vmatpush1.bf16.msra.mxu0 0
        %398 = vmatprep.mubr.bf16.mxu0 0
        %399 = vmatmul.mubr.bf16.gmra.mrb[0].mxu0 %v365
        %v400 = vpop.f32.mrb[0].mxu0
        %v401 = vadd.f32 0.0, %v400
        %v402 = vpop.f32.mrb[0].mxu0
        %v403 = vpop.f32.mrb[0].mxu0
        %v404 = vpop.f32.mrb[0].mxu0
        %405 = vdwg.mxu0
        %v406 = vld [vmem:[%s297] sm:$0x1]
        %v408 = vlaneseq
        %v409 = vshrl.u32 %v408, 7
        %v410 = vsub.s32 0, %v409
        %v411 = vrot.slane %v406, %v410
        %v413 = vmul.f32 %v401, %v411
        %v414 = vrot.slane %v413, 4
        %v415 = vadd.f32 %v413, %v414
        %v416 = vrot.slane %v415, 2
        %v417 = vadd.f32 %v415, %v416
        %v418 = vrot.slane %v417, 1
        %v419 = vadd.f32 %v417, %v418
        %v420 = vrcp.pop 8.0
        %v421 = vmul.f32 %v419, %v420
        %v422 = vmul.f32 %v413, %v413
        %v423 = vrot.slane %v422, 4
        %v424 = vadd.f32 %v422, %v423
        %v425 = vrot.slane %v424, 2
        %v426 = vadd.f32 %v424, %v425
        %v427 = vrot.slane %v426, 1
        %v428 = vadd.f32 %v426, %v427
        %v429 = vmul.f32 %v428, %v420
        %v430 = vmul.f32 %v421, %v421
        %v431 = vsub.f32 %v429, %v430
        %v432 = vmax.f32 %v431, 0.0
        %v433 = vld [vmem:[%s305] sm:$0x1]
        %v434 = vadd.f32 %v432, 1e-05
        %v435 = vrsqrt.pop %v434
        %v436 = vmul.f32 %v433, %v435
        %v437 = vld [vmem:[%s313] sm:$0x1]
        %v438 = vmul.f32 %v421, %v436
        %v439 = vsub.f32 %v437, %v438
        %v441 = vlaneseq
        %v442 = vshrl.u32 %v441, 7
        %v443 = vsub.s32 0, %v442
        %v444 = vrot.slane %v436, %v443
        %v446 = vmul.f32 %v413, %v444
        %v448 = vlaneseq
        %v449 = vshrl.u32 %v448, 7
        %v450 = vsub.s32 0, %v449
        %v451 = vrot.slane %v439, %v450
        %v453 = vadd.f32 %v446, %v451
        %v454 = vmax.f32 %v453, 0.0
        %v455 = vpack.c.bf16 %v454, %v454
        %456 = vst [vmem:[%s351] sm:$0xf] %v455
        %s457 = sand.u32 %s159, 1
        %s458 = scalar_lea.sflag [#allocation4], %s457
        %s459 = sand.u32 %s159, 1
        %s460 = smul.addr %s459, 4
        %s461 = scalar_lea.vmem [#allocation11], %s460
        // Predicated region
        $region61: #{tpu_custom_call.1} parent=39 // pred_check
          %p462 = pneg %p169
        $region62: #{tpu_custom_call.1} parent=39 // pred_check_branch
          %464 = sbr.rel (%p462) target = $region64
        $region63: #{tpu_custom_call.1} parent=39 // pred_region
          %s466 = ssub.s32 64, 64
          %467 = vsyncadd %s458, %s466
          %s468 = smul.addr %s26, 64
          %s469 = scalar_lea.hbm %s5, %s468
          %s471 = sshll.u32 %s461, 4
          %s472 = int_to_ptr.vmem [resolvable:$true] %s471
          %474 = dma.vmem_to_hbm [thread:$0]  %s472, 64, %s469, %s458
        $region64: #{tpu_custom_call.1} parent=39 // pred_fallthru
          _
      $region40: #{tpu_custom_call.1} parent=5 // pred_fallthru
        _
      %p475 = scmp.le.s32.totalorder 2, %s21
      // Predicated region
      $region65: #{tpu_custom_call.1} parent=5 // pred_check
        %p476 = pneg %p475
      $region66: #{tpu_custom_call.1} parent=5 // pred_check_branch
        %478 = sbr.rel (%p476) target = $region68
      $region67: #{tpu_custom_call.1} parent=5 // pred_region
        %s479 = ssub.s32 %s21, 2
        // Predicated region
        $region69: #{tpu_custom_call.1} parent=67 // pred_check
          %p480 = pneg %p175
        $region70: #{tpu_custom_call.1} parent=67 // pred_check_branch
          %482 = sbr.rel (%p480) target = $region72
        $region71: #{tpu_custom_call.1} parent=67 // pred_region
          %s483 = sand.u32 %s160, 1
          %s484 = scalar_lea.sflag [#allocation4], %s483
          %s485 = sand.u32 %s160, 1
          %s486 = smul.addr %s485, 4
          %s487 = scalar_lea.vmem [#allocation11], %s486
          %488 = dma.done %s484, 64
        $region72: #{tpu_custom_call.1} parent=67 // pred_fallthru
          _
      $region68: #{tpu_custom_call.1} parent=5 // pred_fallthru
        _
    $region6: #{tpu_custom_call.1} parent=1 // loop_footer
      %s25 = sadd.s32 1, %s21
    $region7: #{tpu_custom_call.1} parent=1 // loop_footer_branch
      %20 = sbr.rel target = $region3
    $region8: #{tpu_custom_call.1} parent=1 // loop_exit
      _
    %489 = vsyncpa [#allocation3], 1
    %s490 = scalar_lea.sflag [#allocation3], 1
    %491 = vsyncpa %s490, 1
    %492 = vsyncpa [#allocation6], 1
    %s493 = scalar_lea.sflag [#allocation6], 1
    %494 = vsyncpa %s493, 1
    %495 = vsyncpa [#allocation9], 1
    %s496 = scalar_lea.sflag [#allocation9], 1
    %497 = vsyncpa %s496, 1
    %498 = vsyncpa [#allocation4], 1
    %s499 = scalar_lea.sflag [#allocation4], 1
    %500 = vsyncpa %s499, 1

</llo_original>
